<compile_context>
chip_gen: v7x
topology: tpu7x:2x2x1
jax: 0.10.0
libtpu: 0.0.40
codegen_flags: <defaults>
</compile_context>

<pallas_src>
import functools
import math

import jax
import jax.numpy as jnp
from jax import lax
from jax.experimental import pallas as pl
from jax.experimental.pallas import tpu as pltpu


def _round_up(a, b):
    return (a + b - 1) // b * b


def _vmem_capacity_bytes():
    try:
        return int(pltpu.get_tpu_info().vmem_capacity_bytes)
    except Exception:
        return 64 << 20  # conservative: v7x per-TensorCore VMEM


def _is_v5e():
    try:
        kind = jax.devices()[0].device_kind.lower()
        return ("v5 lite" in kind) or ("v5e" in kind) or ("v5litepod" in kind)
    except Exception:
        return False


def _const_block_spec(block_shape, index_map):
    # Blocks whose index_map is constant (w, inv_w, cbias in the resident path)
    # are DMA'd once and never change; double-buffering them only wastes VMEM.
    try:
        return pl.BlockSpec(block_shape, index_map, pipeline_mode=pl.Buffered(1))
    except TypeError:  # older jax without pipeline_mode kwarg
        return pl.BlockSpec(block_shape, index_map)


def _tile_logits(dot, inv_x, inv_w, cbias, s, m):
    """Raw (Bt, Ct) f32 dot products -> (z_e, z_n) exponent arguments."""
    k_e = jnp.float32(s)
    k_c = jnp.float32(s * math.cos(m))
    k_s = jnp.float32(10.0 * s * math.sin(m))
    dotn = dot * inv_x * inv_w                      # == 10 * cosa, |dotn| <= 10
    # sin(acos(cosa)) = sqrt(1 - cosa^2); |cosa| <= 0.1 so a 2-term series in
    # u = cosa^2 is exact to < 1e-7 and stays on the VALU (no EUP sqrt).
    u = dotn * dotn * jnp.float32(0.01)
    sin_a = jnp.float32(1.0) - jnp.float32(0.5) * u - jnp.float32(0.125) * (u * u)
    z_e = dotn * k_e + cbias                        # s * cosa * 10        (+mask)
    z_n = dotn * k_c - sin_a * k_s + cbias          # s * cos(acos+m) * 10 (+mask)
    return z_e, z_n


# --------------------------- resident-w fast path ---------------------------

def _arcsoftmax_resident_kernel(x_ref, w_ref, inv_x_ref, inv_w_ref, cbias_ref,
                                o_ref, *, s, m):
    dot = jnp.dot(x_ref[...], w_ref[...], preferred_element_type=jnp.float32)
    z_e, z_n = _tile_logits(dot, inv_x_ref[...], inv_w_ref[...],
                            cbias_ref[...], s, m)
    # One merged row-max (single XLU reduction); cancels in the ratio, keeps
    # the exponentials finite for large s.
    rmax = jnp.max(jnp.maximum(z_e, z_n), axis=1, keepdims=True)
    e = jnp.exp(z_e - rmax)
    num = jnp.exp(z_n - rmax)
    denom = jnp.sum(e, axis=1, keepdims=True) - e + num
    r = pl.reciprocal(denom, approx=True)
    r = r * (jnp.float32(2.0) - denom * r)          # one Newton step -> ~f32 acc.
    o_ref[...] = (num * r).astype(o_ref.dtype)


# ------------------------- class-tiled (streaming-w) ------------------------

def _arcsoftmax_stats_kernel(x_ref, w_ref, inv_x_ref, inv_w_ref, cbias_ref,
                             rmax_ref, sume_ref, *, s, m):
    j = pl.program_id(1)

    @pl.when(j == 0)
    def _():
        rmax_ref[...] = jnp.full(rmax_ref.shape, -1e30, jnp.float32)
        sume_ref[...] = jnp.zeros(sume_ref.shape, jnp.float32)

    dot = jnp.dot(x_ref[...], w_ref[...], preferred_element_type=jnp.float32)
    z_e, z_n = _tile_logits(dot, inv_x_ref[...], inv_w_ref[...],
                            cbias_ref[...], s, m)
    m_old = rmax_ref[...]
    m_new = jnp.maximum(m_old,
                        jnp.max(jnp.maximum(z_e, z_n), axis=1, keepdims=True))
    rmax_ref[...] = m_new
    sume_ref[...] = (sume_ref[...] * jnp.exp(m_old - m_new)
                     + jnp.sum(jnp.exp(z_e - m_new), axis=1, keepdims=True))


def _arcsoftmax_tiled_out_kernel(x_ref, w_ref, inv_x_ref, inv_w_ref, cbias_ref,
                                 rmax_ref, sume_ref, o_ref, *, s, m):
    dot = jnp.dot(x_ref[...], w_ref[...], preferred_element_type=jnp.float32)
    z_e, z_n = _tile_logits(dot, inv_x_ref[...], inv_w_ref[...],
                            cbias_ref[...], s, m)
    rmax = rmax_ref[...]
    e = jnp.exp(z_e - rmax)
    num = jnp.exp(z_n - rmax)
    denom = sume_ref[...] - e + num
    r = pl.reciprocal(denom, approx=True)
    r = r * (jnp.float32(2.0) - denom * r)
    o_ref[...] = (num * r).astype(o_ref.dtype)


# --------------------------------- wrapper ----------------------------------

def arcsoftmax(x, w, s=1.0, m=0.2, *, block_b=None, block_c=None,
               out_dtype=jnp.float32, matmul_dtype=None,
               force_class_tiling=False):
    """Pallas Arcsoftmax forward.  x: (batch, F), w: (F, C) -> (batch, C)."""
    batch, feature_num = x.shape
    fw, cls_num = w.shape
    assert feature_num == fw

    s = float(s)
    m = float(m)
    eps = jnp.float32(1e-12)
    in_dtype = matmul_dtype if matmul_dtype is not None else x.dtype
    in_item = jnp.dtype(in_dtype).itemsize
    out_item = jnp.dtype(out_dtype).itemsize

    f_pad = _round_up(feature_num, 8)            # sublane alignment

    # ------------------------ VMEM budget / tiling -------------------------
    vmem_cap = _vmem_capacity_bytes()
    budget = max(vmem_cap - (8 << 20), 16 << 20)
    default_bb = 128 if _is_v5e() else 256

    if block_b is not None:
        bb_candidates = [_round_up(block_b, 8)]
    else:
        bb_candidates = [c for c in (default_bb, 128, 64, 32, 16, 8)
                         if c <= default_bb]
    bb_candidates = [max(8, min(c, _round_up(batch, 8))) for c in bb_candidates]
    seen = set()
    bb_candidates = [c for c in bb_candidates if not (c in seen or seen.add(c))]

    c_pad_res = _round_up(cls_num, 128)

    def resident_bytes(bb_):
        temps = 8 * bb_ * c_pad_res * 4          # live full-width f32 temporaries
        return (2 * bb_ * f_pad * in_item        # x (double-buffered)
                + f_pad * c_pad_res * in_item    # w (single-buffered, Buffered(1))
                + 2 * bb_ * c_pad_res * out_item # out (double-buffered)
                + temps + (2 << 20))

    bb_res = next((c for c in bb_candidates if resident_bytes(c) <= budget), None)
    use_tiled = force_class_tiling or bb_res is None

    def _prepare(padded_batch, c_pad):
        x_p = x
        if (padded_batch, f_pad) != (batch, feature_num):
            x_p = jnp.pad(x, ((0, padded_batch - batch),
                              (0, f_pad - feature_num)))
        w_p = w
        if (f_pad, c_pad) != (feature_num, cls_num):
            w_p = jnp.pad(w, ((0, f_pad - feature_num),
                              (0, c_pad - cls_num)))
        inv_x = lax.rsqrt(jnp.maximum(
            jnp.sum(jnp.square(x_p.astype(jnp.float32)), axis=1, keepdims=True),
            eps * eps))
        inv_w = lax.rsqrt(jnp.maximum(
            jnp.sum(jnp.square(w_p.astype(jnp.float32)), axis=0, keepdims=True),
            eps * eps))
        # Additive bias disabling padded class columns (e = num = 0 there).
        cbias = jnp.where(jnp.arange(c_pad) < cls_num,
                          jnp.float32(0.0), jnp.float32(-1e30)).reshape(1, c_pad)
        if matmul_dtype is not None:
            x_p = x_p.astype(matmul_dtype)
            w_p = w_p.astype(matmul_dtype)
        return x_p, w_p, inv_x, inv_w, cbias

    if not use_tiled:
        # -------------------------- resident-w path -------------------------
        bb = bb_res
        c_pad = c_pad_res
        padded_batch = _round_up(batch, bb)
        x_p, w_p, inv_x, inv_w, cbias = _prepare(padded_batch, c_pad)

        vmem_limit = int(min(max(resident_bytes(bb), 32 << 20),
                             vmem_cap - (8 << 20)))
        kernel = functools.partial(_arcsoftmax_resident_kernel, s=s, m=m)
        out = pl.pallas_call(
            kernel,
            out_shape=jax.ShapeDtypeStruct((padded_batch, c_pad), out_dtype),
            grid=(padded_batch // bb,),
            in_specs=[
                pl.BlockSpec((bb, f_pad), lambda i: (i, 0)),
                _const_block_spec((f_pad, c_pad), lambda i: (0, 0)),
                pl.BlockSpec((bb, 1), lambda i: (i, 0)),
                _const_block_spec((1, c_pad), lambda i: (0, 0)),
                _const_block_spec((1, c_pad), lambda i: (0, 0)),
            ],
            out_specs=pl.BlockSpec((bb, c_pad), lambda i: (i, 0)),
            compiler_params=pltpu.CompilerParams(
                dimension_semantics=("parallel",),
                vmem_limit_bytes=vmem_limit),
            cost_estimate=pl.CostEstimate(
                flops=2 * padded_batch * f_pad * c_pad,
                transcendentals=3 * padded_batch * c_pad,
                bytes_accessed=(in_item * (padded_batch * f_pad + f_pad * c_pad)
                                + out_item * padded_batch * c_pad)),
        )(x_p, w_p, inv_x, inv_w, cbias)
        return out[:batch, :cls_num]

    # ------------------------ class-tiled (streaming-w) ---------------------
    bc = 512 if block_c is None else max(128, _round_up(block_c, 128))
    bc = min(bc, _round_up(cls_num, 128))
    bb = bb_candidates[0]

    def tiled_bytes(bb_, bc_):
        temps = 8 * bb_ * bc_ * 4
        return (2 * bb_ * f_pad * in_item + 2 * f_pad * bc_ * in_item
                + 2 * bb_ * bc_ * out_item + temps + (2 << 20))

    while bc > 128 and tiled_bytes(bb, bc) > budget:
        bc = max(128, (bc // 2) // 128 * 128)
    while bb > 8 and tiled_bytes(bb, bc) > budget:
        bb = max(8, (bb // 2) // 8 * 8)

    c_pad = _round_up(cls_num, bc)
    padded_batch = _round_up(batch, bb)
    x_p, w_p, inv_x, inv_w, cbias = _prepare(padded_batch, c_pad)

    grid = (padded_batch // bb, c_pad // bc)
    vmem_limit = int(min(max(tiled_bytes(bb, bc), 32 << 20),
                         vmem_cap - (8 << 20)))

    # Pass 1: per-row running max and sum(exp) over class tiles (accumulators
    # in the (bb, 1) output blocks, class axis "arbitrary").
    rmax, sume = pl.pallas_call(
        functools.partial(_arcsoftmax_stats_kernel, s=s, m=m),
        out_shape=(jax.ShapeDtypeStruct((padded_batch, 1), jnp.float32),
                   jax.ShapeDtypeStruct((padded_batch, 1), jnp.float32)),
        grid=grid,
        in_specs=[
            pl.BlockSpec((bb, f_pad), lambda i, j: (i, 0)),
            pl.BlockSpec((f_pad, bc), lambda i, j: (0, j)),
            pl.BlockSpec((bb, 1), lambda i, j: (i, 0)),
            pl.BlockSpec((1, bc), lambda i, j: (0, j)),
            pl.BlockSpec((1, bc), lambda i, j: (0, j)),
        ],
        out_specs=(pl.BlockSpec((bb, 1), lambda i, j: (i, 0)),
                   pl.BlockSpec((bb, 1), lambda i, j: (i, 0))),
        compiler_params=pltpu.CompilerParams(
            dimension_semantics=("parallel", "arbitrary"),
            vmem_limit_bytes=vmem_limit),
        cost_estimate=pl.CostEstimate(
            flops=2 * padded_batch * f_pad * c_pad,
            transcendentals=padded_batch * c_pad,
            bytes_accessed=(in_item * (padded_batch * f_pad + f_pad * c_pad)
                            + 8 * padded_batch)),
    )(x_p, w_p, inv_x, inv_w, cbias)

    # Pass 2: each (bb, bc) output tile emitted exactly once.
    out = pl.pallas_call(
        functools.partial(_arcsoftmax_tiled_out_kernel, s=s, m=m),
        out_shape=jax.ShapeDtypeStruct((padded_batch, c_pad), out_dtype),
        grid=grid,
        in_specs=[
            pl.BlockSpec((bb, f_pad), lambda i, j: (i, 0)),
            pl.BlockSpec((f_pad, bc), lambda i, j: (0, j)),
            pl.BlockSpec((bb, 1), lambda i, j: (i, 0)),
            pl.BlockSpec((1, bc), lambda i, j: (0, j)),
            pl.BlockSpec((1, bc), lambda i, j: (0, j)),
            pl.BlockSpec((bb, 1), lambda i, j: (i, 0)),
            pl.BlockSpec((bb, 1), lambda i, j: (i, 0)),
        ],
        out_specs=pl.BlockSpec((bb, bc), lambda i, j: (i, j)),
        compiler_params=pltpu.CompilerParams(
            dimension_semantics=("parallel", "parallel"),
            vmem_limit_bytes=vmem_limit),
        cost_estimate=pl.CostEstimate(
            flops=2 * padded_batch * f_pad * c_pad,
            transcendentals=3 * padded_batch * c_pad,
            bytes_accessed=(in_item * (padded_batch * f_pad + f_pad * c_pad)
                            + out_item * padded_batch * c_pad)),
    )(x_p, w_p, inv_x, inv_w, cbias, rmax, sume)
    return out[:batch, :cls_num]


def arcsoftmax_ref(x, w, s=1.0, m=0.2):
    """Pure-JAX reference mirroring the PyTorch module."""
    eps = 1e-12
    x_norm = x / jnp.maximum(jnp.linalg.norm(x, axis=1, keepdims=True), eps)
    w_norm = w / jnp.maximum(jnp.linalg.norm(w, axis=0, keepdims=True), eps)
    cosa = jnp.matmul(x_norm, w_norm) / 10.0
    a = jnp.arccos(cosa)
    num = jnp.exp(s * jnp.cos(a + m) * 10.0)
    e = jnp.exp(s * cosa * 10.0)
    return num / (jnp.sum(e, axis=1, keepdims=True) - e + num)


if __name__ == "__main__":
    key = jax.random.PRNGKey(0)
    kx, kw = jax.random.split(key)

    # Main (resident-w) path.
    batch, feature_num, cls_num = 8, 32, 128
    x = jax.random.normal(kx, (batch, feature_num), dtype=jnp.float32)
    w = jax.random.normal(kw, (feature_num, cls_num), dtype=jnp.float32)

    out = jax.block_until_ready(arcsoftmax(x, w, s=1.0, m=0.2))
    ref = arcsoftmax_ref(x, w, s=1.0, m=0.2)
    assert out.shape == (batch, cls_num)
    assert jnp.allclose(out, ref, atol=2e-5, rtol=2e-5)

    # Class-tiled (streaming-w) path + batch/class padding exercised.
    b2, f2, c2 = 10, 32, 200
    x2 = jax.random.normal(jax.random.PRNGKey(1), (b2, f2), dtype=jnp.float32)
    w2 = jax.random.normal(jax.random.PRNGKey(2), (f2, c2), dtype=jnp.float32)
    out2 = jax.block_until_ready(
        arcsoftmax(x2, w2, s=1.0, m=0.2, force_class_tiling=True, block_c=128))
    ref2 = arcsoftmax_ref(x2, w2, s=1.0, m=0.2)
    assert out2.shape == (b2, c2)
    assert jnp.allclose(out2, ref2, atol=2e-5, rtol=2e-5)

    print("KERNEL_OK")
</pallas_src>

<mosaic_0001>
module attributes {stable_mosaic.version = 11 : i64} {
  func.func @_arcsoftmax_resident_kernel(%arg0: i32, %arg1: memref<8x32xf32, #tpu.memory_space<vmem>>, %arg2: memref<32x128xf32, #tpu.memory_space<vmem>>, %arg3: memref<8x1xf32, #tpu.memory_space<vmem>>, %arg4: memref<1x128xf32, #tpu.memory_space<vmem>>, %arg5: memref<1x128xf32, #tpu.memory_space<vmem>>, %arg6: memref<8x128xf32, #tpu.memory_space<vmem>>) attributes {dimension_semantics = [#tpu.dimension_semantics<parallel>], iteration_bounds = array<i64: 1>, scalar_prefetch = 0 : i64, scratch_operands = 0 : i64, tpu.core_type = #tpu.core_type<tc>, window_params = [{transform_indices = @transform_0, window_bounds = array<i64: 8, 32>}, {pipeline_mode = #tpu.pipeline_mode<synchronous>, transform_indices = @transform_1, window_bounds = array<i64: 32, 128>}, {transform_indices = @transform_2, window_bounds = array<i64: 8, 1>}, {pipeline_mode = #tpu.pipeline_mode<synchronous>, transform_indices = @transform_3, window_bounds = array<i64: 1, 128>}, {pipeline_mode = #tpu.pipeline_mode<synchronous>, transform_indices = @transform_4, window_bounds = array<i64: 1, 128>}, {transform_indices = @transform_5, window_bounds = array<i64: 8, 128>}]} {
    %c0 = arith.constant 0 : index
    %c0_0 = arith.constant 0 : index
    %0 = vector.load %arg1[%c0, %c0_0] : memref<8x32xf32, #tpu.memory_space<vmem>>, vector<8x32xf32>
    %c0_1 = arith.constant 0 : index
    %c0_2 = arith.constant 0 : index
    %1 = vector.load %arg2[%c0_1, %c0_2] : memref<32x128xf32, #tpu.memory_space<vmem>>, vector<32x128xf32>
    %cst = arith.constant dense<0.000000e+00> : vector<8x128xf32>
    %2 = tpu.matmul %0, %1, %cst {dimension_numbers = #tpu.dot_dimension_numbers<[1], [0], [0], [1], [0, 0, 1, 1], [], []>} : vector<8x32xf32>, vector<32x128xf32>, vector<8x128xf32> -> vector<8x128xf32>
    %c0_3 = arith.constant 0 : index
    %c0_4 = arith.constant 0 : index
    %3 = vector.load %arg3[%c0_3, %c0_4] : memref<8x1xf32, #tpu.memory_space<vmem>>, vector<8x1xf32>
    %c0_5 = arith.constant 0 : index
    %c0_6 = arith.constant 0 : index
    %4 = vector.load %arg4[%c0_5, %c0_6] : memref<1x128xf32, #tpu.memory_space<vmem>>, vector<1x128xf32>
    %c0_7 = arith.constant 0 : index
    %c0_8 = arith.constant 0 : index
    %5 = vector.load %arg5[%c0_7, %c0_8] : memref<1x128xf32, #tpu.memory_space<vmem>>, vector<1x128xf32>
    %6 = vector.broadcast %3 : vector<8x1xf32> to vector<8x128xf32>
    %7 = arith.mulf %2, %6 : vector<8x128xf32>
    %8 = vector.broadcast %4 : vector<1x128xf32> to vector<8x128xf32>
    %9 = arith.mulf %7, %8 : vector<8x128xf32>
    %10 = arith.mulf %9, %9 : vector<8x128xf32>
    %cst_9 = arith.constant 0.00999999977 : f32
    %11 = vector.broadcast %cst_9 : f32 to vector<8x128xf32>
    %12 = arith.mulf %10, %11 : vector<8x128xf32>
    %cst_10 = arith.constant 5.000000e-01 : f32
    %13 = vector.broadcast %cst_10 : f32 to vector<8x128xf32>
    %14 = arith.mulf %13, %12 : vector<8x128xf32>
    %cst_11 = arith.constant 1.000000e+00 : f32
    %15 = vector.broadcast %cst_11 : f32 to vector<8x128xf32>
    %16 = arith.subf %15, %14 : vector<8x128xf32>
    %17 = arith.mulf %12, %12 : vector<8x128xf32>
    %cst_12 = arith.constant 1.250000e-01 : f32
    %18 = vector.broadcast %cst_12 : f32 to vector<8x128xf32>
    %19 = arith.mulf %18, %17 : vector<8x128xf32>
    %20 = arith.subf %16, %19 : vector<8x128xf32>
    %cst_13 = arith.constant 1.000000e+00 : f32
    %21 = vector.broadcast %cst_13 : f32 to vector<8x128xf32>
    %22 = arith.mulf %9, %21 : vector<8x128xf32>
    %23 = vector.broadcast %5 : vector<1x128xf32> to vector<8x128xf32>
    %24 = arith.addf %22, %23 : vector<8x128xf32>
    %cst_14 = arith.constant 0.980066597 : f32
    %25 = vector.broadcast %cst_14 : f32 to vector<8x128xf32>
    %26 = arith.mulf %9, %25 : vector<8x128xf32>
    %cst_15 = arith.constant 1.98669326 : f32
    %27 = vector.broadcast %cst_15 : f32 to vector<8x128xf32>
    %28 = arith.mulf %20, %27 : vector<8x128xf32>
    %29 = arith.subf %26, %28 : vector<8x128xf32>
    %30 = vector.broadcast %5 : vector<1x128xf32> to vector<8x128xf32>
    %31 = arith.addf %29, %30 : vector<8x128xf32>
    %32 = arith.maximumf %24, %31 : vector<8x128xf32>
    %cst_16 = arith.constant dense<0xFF800000> : vector<8xf32>
    %33 = vector.multi_reduction <maximumf>, %32, %cst_16 [1] : vector<8x128xf32> to vector<8xf32>
    %34 = vector.shape_cast %33 : vector<8xf32> to vector<8x1xf32>
    %35 = vector.broadcast %34 : vector<8x1xf32> to vector<8x128xf32>
    %36 = arith.subf %24, %35 : vector<8x128xf32>
    %37 = math.exp %36 : vector<8x128xf32>
    %38 = vector.broadcast %34 : vector<8x1xf32> to vector<8x128xf32>
    %39 = arith.subf %31, %38 : vector<8x128xf32>
    %40 = math.exp %39 : vector<8x128xf32>
    %cst_17 = arith.constant dense<0.000000e+00> : vector<8xf32>
    %41 = vector.multi_reduction <add>, %37, %cst_17 [1] : vector<8x128xf32> to vector<8xf32>
    %42 = vector.shape_cast %41 : vector<8xf32> to vector<8x1xf32>
    %43 = vector.broadcast %42 : vector<8x1xf32> to vector<8x128xf32>
    %44 = arith.subf %43, %37 : vector<8x128xf32>
    %45 = arith.addf %44, %40 : vector<8x128xf32>
    %46 = tpu.reciprocal %45 {approx = true} : vector<8x128xf32> -> vector<8x128xf32>
    %47 = arith.mulf %45, %46 : vector<8x128xf32>
    %cst_18 = arith.constant 2.000000e+00 : f32
    %48 = vector.broadcast %cst_18 : f32 to vector<8x128xf32>
    %49 = arith.subf %48, %47 : vector<8x128xf32>
    %50 = arith.mulf %46, %49 : vector<8x128xf32>
    %51 = arith.mulf %40, %50 : vector<8x128xf32>
    %c0_19 = arith.constant 0 : index
    %c0_20 = arith.constant 0 : index
    %52 = vector.load %arg6[%c0_19, %c0_20] : memref<8x128xf32, #tpu.memory_space<vmem>>, vector<8x128xf32>
    tpu.vector_store %arg6[%c0_19, %c0_20], %51 {strides = array<i32>} : memref<8x128xf32, #tpu.memory_space<vmem>>, vector<8x128xf32>,
    return
  }
  func.func @transform_0(%arg0: i32) -> (i32, i32) {
    %c0_i32 = arith.constant 0 : i32
    %c0_i32_0 = arith.constant 0 : i32
    return %arg0, %c0_i32 : i32, i32
  }
  func.func @transform_1(%arg0: i32) -> (i32, i32) {
    %c0_i32 = arith.constant 0 : i32
    %c0_i32_0 = arith.constant 0 : i32
    %c0_i32_1 = arith.constant 0 : i32
    return %c0_i32, %c0_i32_0 : i32, i32
  }
  func.func @transform_2(%arg0: i32) -> (i32, i32) {
    %c0_i32 = arith.constant 0 : i32
    %c0_i32_0 = arith.constant 0 : i32
    return %arg0, %c0_i32 : i32, i32
  }
  func.func @transform_3(%arg0: i32) -> (i32, i32) {
    %c0_i32 = arith.constant 0 : i32
    %c0_i32_0 = arith.constant 0 : i32
    %c0_i32_1 = arith.constant 0 : i32
    return %c0_i32, %c0_i32_0 : i32, i32
  }
  func.func @transform_4(%arg0: i32) -> (i32, i32) {
    %c0_i32 = arith.constant 0 : i32
    %c0_i32_0 = arith.constant 0 : i32
    %c0_i32_1 = arith.constant 0 : i32
    return %c0_i32, %c0_i32_0 : i32, i32
  }
  func.func @transform_5(%arg0: i32) -> (i32, i32) {
    %c0_i32 = arith.constant 0 : i32
    %c0_i32_0 = arith.constant 0 : i32
    return %arg0, %c0_i32 : i32, i32
  }
}

</mosaic_0001>

<llo_original>
// kernel: tpu_custom_call.1
$region0: #{tpu_custom_call.1}
  #allocation0 [shape = 'u32[]', space=smem, size = 0x4, offset = 0x4, fixed_abs, tag = 'smem constant byte address 0x4 - core index']
  #allocation1 [shape = 'u32[144,128]{1,0:T(1,128)}', space=vmem, size = 0x12000, scoped, tag = 'internal scratch']
  %s0 = inlined_call_operand.vmem [shape: f32[8,32], index: 0, kind: input, shape index: {}]
  %s1 = inlined_call_operand.hbm [shape: f32[32,128], index: 1, kind: input, shape index: {}]
  %s2 = inlined_call_operand.vmem [shape: f32[8,1], index: 2, kind: input, shape index: {}]
  %s3 = inlined_call_operand.vmem [shape: f32[1,128], index: 3, kind: input, shape index: {}]
  %s4 = inlined_call_operand.vmem [shape: f32[1,128], index: 4, kind: input, shape index: {}]
  %s5 = inlined_call_operand.hbm [shape: f32[8,128], index: 5, kind: output, shape index: {}]
  %s6 = sld [smem:[#allocation0]]
  $region34: #{tpu_custom_call.1} parent=0
    _
  %s8 = ssub.s32 1, %s6
  %s9 = scalar_select 0, %s8, %s6
  $region1: #{tpu_custom_call.1} parent=0
    #allocation2 [shape = 'u8[16384]{0}', space=vmem, size = 0x4000, scoped, tag = 'input window, operand 1, single buffered']
    #allocation3 [shape = 's32[1]{0}', space=sflag, size = 0x4, scoped, tag = 'scoped memory for tpu_custom_call.1']
    #allocation4 [shape = 's32[1]{0}', space=sflag, size = 0x4, scoped, tag = 'scoped memory for tpu_custom_call.1']
    #allocation5 [shape = 'u8[4096]{0}', space=vmem, size = 0x1000, scoped, tag = 'output window, operand 0, single buffered']
    %10 = vsyncpa [#allocation3], 0
    %11 = vsyncpa [#allocation4], 0
    // Predicated region
    $region2: #{tpu_custom_call.1} parent=1 // pred_check
      _
    $region3: #{tpu_custom_call.1} parent=1 // pred_check_branch
      %13 = sbr.rel (0) target = $region5
    $region4: #{tpu_custom_call.1} parent=1 // pred_region
      _
    $region5: #{tpu_custom_call.1} parent=1 // pred_fallthru
      _
    // Predicated region
    $region6: #{tpu_custom_call.1} parent=1 // pred_check
      _
    $region7: #{tpu_custom_call.1} parent=1 // pred_check_branch
      %15 = sbr.rel (0) target = $region9
    $region8: #{tpu_custom_call.1} parent=1 // pred_region
      %s17 = ssub.s32 512, 512
      %18 = vsyncadd [#allocation3], %s17
      %s19 = sshll.u32 [#allocation2], 4
      %s20 = int_to_ptr.vmem [resolvable:$true] %s19
      %25 = dma.hbm_to_vmem [thread:$0]  %s1, 512, %s20, [#allocation3], 128, 128, 8
    $region9: #{tpu_custom_call.1} parent=1 // pred_fallthru
      _
    // Predicated region
    $region10: #{tpu_custom_call.1} parent=1 // pred_check
      _
    $region11: #{tpu_custom_call.1} parent=1 // pred_check_branch
      %27 = sbr.rel (0) target = $region13
    $region12: #{tpu_custom_call.1} parent=1 // pred_region
      _
    $region13: #{tpu_custom_call.1} parent=1 // pred_fallthru
      _
    // Predicated region
    $region14: #{tpu_custom_call.1} parent=1 // pred_check
      _
    $region15: #{tpu_custom_call.1} parent=1 // pred_check_branch
      %29 = sbr.rel (0) target = $region17
    $region16: #{tpu_custom_call.1} parent=1 // pred_region
      _
    $region17: #{tpu_custom_call.1} parent=1 // pred_fallthru
      _
    // Predicated region
    $region18: #{tpu_custom_call.1} parent=1 // pred_check
      _
    $region19: #{tpu_custom_call.1} parent=1 // pred_check_branch
      %31 = sbr.rel (0) target = $region21
    $region20: #{tpu_custom_call.1} parent=1 // pred_region
      _
    $region21: #{tpu_custom_call.1} parent=1 // pred_fallthru
      _
    // Predicated region
    $region22: #{tpu_custom_call.1} parent=1 // pred_check
      _
    $region23: #{tpu_custom_call.1} parent=1 // pred_check_branch
      %33 = sbr.rel (0) target = $region25
    $region24: #{tpu_custom_call.1} parent=1 // pred_region
      %34 = dma.done [#allocation3], 512
    $region25: #{tpu_custom_call.1} parent=1 // pred_fallthru
      _
    %v35 = vld [vmem:[%s0] sm:$0xff]
    %v36 = vld [vmem:[#allocation2] sm:$0xff]
    %v37 = vld [vmem:[#allocation2 + $0x8] sm:$0xff]
    %v38 = vld [vmem:[#allocation2 + $0x10] sm:$0xff]
    %v39 = vld [vmem:[#allocation2 + $0x18] sm:$0xff]
    %vm40 = vcmask 261120
    %v42 = vsel %vm40, %v35, 0
    %44 = vmatprep.subr.mxu0 0.0
    %45 = vmatpush1.msra.mxu0 %v36
    %46 = vmatprep.subr.mxu0 0.0
    %47 = vmatpush1.msra.mxu0 %v37
    %48 = vmatprep.subr.mxu0 0.0
    %49 = vmatpush1.msra.mxu0 %v38
    %50 = vmatprep.subr.mxu0 0.0
    %51 = vmatpush1.msra.mxu0 %v39
    %52 = vmatprep.subr.mxu0 0.0
    %53 = vmatpush1.msra.mxu0 0.0
    %54 = vmatprep.subr.mxu0 0.0
    %55 = vmatpush1.msra.mxu0 0.0
    %56 = vmatprep.subr.mxu0 0.0
    %57 = vmatpush1.msra.mxu0 0.0
    %58 = vmatprep.subr.mxu0 0.0
    %59 = vmatpush1.msra.mxu0 0.0
    %60 = vmatprep.subr.mxu0 0.0
    %61 = vmatpush1.msra.mxu0 0.0
    %62 = vmatprep.subr.mxu0 0.0
    %63 = vmatpush1.msra.mxu0 0.0
    %64 = vmatprep.subr.mxu0 0.0
    %65 = vmatpush1.msra.mxu0 0.0
    %66 = vmatprep.subr.mxu0 0.0
    %67 = vmatpush1.msra.mxu0 0.0
    %68 = vmatprep.subr.mxu0 0.0
    %69 = vmatpush1.msra.mxu0 0.0
    %70 = vmatprep.subr.mxu0 0.0
    %71 = vmatpush1.msra.mxu0 0.0
    %72 = vmatprep.subr.mxu0 0.0
    %73 = vmatpush1.msra.mxu0 0.0
    %74 = vmatprep.subr.mxu0 0.0
    %75 = vmatpush1.msra.mxu0 0.0
    %76 = vmatprep.subr.mxu0 0.0
    %77 = vmatpush1.msra.mxu0 0.0
    %78 = vmatprep.subr.mxu0 0.0
    %79 = vmatpush1.msra.mxu0 0.0
    %80 = vmatprep.subr.mxu0 0.0
    %81 = vmatpush1.msra.mxu0 0.0
    %82 = vmatprep.subr.mxu0 0.0
    %83 = vmatpush1.msra.mxu0 0.0
    %84 = vmatprep.subr.mxu0 0.0
    %85 = vmatpush1.msra.mxu0 0.0
    %86 = vmatprep.subr.mxu0 0.0
    %87 = vmatpush1.msra.mxu0 0.0
    %88 = vmatprep.subr.mxu0 0.0
    %89 = vmatpush1.msra.mxu0 0.0
    %90 = vmatprep.subr.mxu0 0.0
    %91 = vmatpush1.msra.mxu0 0.0
    %92 = vmatprep.subr.mxu0 0.0
    %93 = vmatpush1.msra.mxu0 0.0
    %94 = vmatprep.subr.mxu0 0.0
    %95 = vmatpush1.msra.mxu0 0.0
    %96 = vmatprep.subr.mxu0 0.0
    %97 = vmatpush1.msra.mxu0 0.0
    %98 = vmatprep.subr.mxu0 0.0
    %99 = vmatpush1.msra.mxu0 0.0
    %100 = vmatprep.subr.mxu0 0.0
    %101 = vmatpush1.msra.mxu0 0.0
    %102 = vmatprep.subr.mxu0 0.0
    %103 = vmatpush1.msra.mxu0 0.0
    %104 = vmatprep.subr.mxu0 0.0
    %105 = vmatpush1.msra.mxu0 0.0
    %106 = vmatprep.subr.mxu0 0.0
    %107 = vmatpush1.msra.mxu0 0.0
    %108 = vmatprep.mubr.f32.mxu0 0.0
    %109 = vmatmul.mubr.f32.gmra.mrb[0].mxu0 %v42
    %v110 = vpop.f32.mrb[0].mxu0
    %v111 = vadd.f32 0.0, %v110
    %v112 = vpop.f32.mrb[0].mxu0
    %113 = vdwg.mxu0
    %v114 = vld [vmem:[%s2] sm:$0xff]
    %v115 = vld [vmem:[%s3] sm:$0x1]
    %v116 = vld [vmem:[%s4] sm:$0x1]
    %118 = vset.pattern.permute.xlu0 0
    %119 = vperm.xlu0 %118, %v114
    %v120 = vpop.permute.xlu0 %119
    %v122 = vmul.f32 %v111, %v120
    %v124 = vlaneseq
    %v125 = vshrl.u32 %v124, 7
    %v126 = vsub.s32 0, %v125
    %v127 = vrot.slane %v115, %v126
    %v129 = vmul.f32 %v122, %v127
    %v130 = vmul.f32 %v129, %v129
    %v131 = vmul.f32 %v130, 0.01
    %v132 = vmul.f32 %v131, 0.5
    %v133 = vsub.f32 1.0, %v132
    %v134 = vmul.f32 %v131, %v131
    %v135 = vmul.f32 %v134, 0.125
    %v136 = vsub.f32 %v133, %v135
    %v138 = vlaneseq
    %v139 = vshrl.u32 %v138, 7
    %v140 = vsub.s32 0, %v139
    %v141 = vrot.slane %v116, %v140
    %v143 = vadd.f32 %v129, %v141
    %v144 = vmul.f32 %v129, 0.9800666
    %v145 = vmul.f32 %v136, 1.9866933
    %v146 = vsub.f32 %v144, %v145
    %v147 = vadd.f32 %v146, %v141
    %v148 = vmax.f32 %v143, %v147
    %149 = vmax.xlane.f32.xlu0 %v148
    %v150 = vpop.xlane.xlu0 %149
    %v151 = vsub.f32 %v143, %v150
    %v152 = vmul.f32 %v151, 1.442695
    %v153 = vpow.pop %v152
    %v154 = vsub.f32 %v147, %v150
    %v155 = vmul.f32 %v154, 1.442695
    %v156 = vpow.pop %v155
    %157 = vadd.xlane.f32.xlu0 %v153
    %v158 = vpop.xlane.xlu0 %157
    %v159 = vsub.f32 %v158, %v153
    %v160 = vadd.f32 %v159, %v156
    %v161 = vrcp.pop %v160
    %v162 = vmul.f32 %v160, %v161
    %v163 = vsub.f32 2.0, %v162
    %v164 = vmul.f32 %v161, %v163
    %v165 = vmul.f32 %v156, %v164
    %166 = vst [vmem:[#allocation5] sm:$0xff] %v165
    // Predicated region
    $region26: #{tpu_custom_call.1} parent=1 // pred_check
      _
    $region27: #{tpu_custom_call.1} parent=1 // pred_check_branch
      %168 = sbr.rel (0) target = $region29
    $region28: #{tpu_custom_call.1} parent=1 // pred_region
      %s170 = ssub.s32 128, 128
      %171 = vsyncadd [#allocation4], %s170
      %s173 = sshll.u32 [#allocation5], 4
      %s174 = int_to_ptr.vmem [resolvable:$true] %s173
      %176 = dma.vmem_to_hbm [thread:$0]  %s174, 128, %s5, [#allocation4]
    $region29: #{tpu_custom_call.1} parent=1 // pred_fallthru
      _
    // Predicated region
    $region30: #{tpu_custom_call.1} parent=1 // pred_check
      _
    $region31: #{tpu_custom_call.1} parent=1 // pred_check_branch
      %178 = sbr.rel (0) target = $region33
    $region32: #{tpu_custom_call.1} parent=1 // pred_region
      %179 = dma.done [#allocation4], 128
    $region33: #{tpu_custom_call.1} parent=1 // pred_fallthru
      _
    %180 = vsyncpa [#allocation3], 1
    %181 = vsyncpa [#allocation4], 1

</llo_original>
